<compile_context>
chip_gen: v7x
topology: tpu7x:2x2x1
jax: 0.10.0
libtpu: 0.0.40
codegen_flags: <defaults>
</compile_context>

<pallas_src>
import jax
import jax.numpy as jnp
import numpy as np
from jax.experimental import pallas as pl
from jax.experimental.pallas import tpu as pltpu

NODE_DIM = 32
HIDDEN_DIM = 16


# ----------------------------- tile helpers --------------------------------

def _pick_sublane_tile(dim, preferred):
    """Tile for a second-to-last block dim: divides dim and is a multiple of 8
    (or covers the whole dim)."""
    if dim <= preferred:
        return dim
    for t in range(preferred, 7, -1):
        if dim % t == 0 and t % 8 == 0:
            return t
    return dim


def _pick_lane_tile(dim, preferred):
    """Tile for a last block dim: divides dim and is a multiple of 128
    (or covers the whole dim)."""
    if dim <= preferred:
        return dim
    for t in range(preferred, 127, -1):
        if dim % t == 0 and t % 128 == 0:
            return t
    return dim


# ----------------------------- Pallas kernels -------------------------------

def _mlp_fused_kernel(x_ref, w1_ref, w1t_ref, b1_ref, w2_ref, b2_ref,
                      e_ref, gx_ref):
    # x:[TN,D]  w1:[D,H]  w1t:[H,D]  b1:[1,H]  w2:[1,H]  b2:[1,1]
    # outputs: e:[TN,1]  gx:[TN,D]  (gx = d(sum E)/dx, cotangent of E is ones)
    x = x_ref[...]
    w2 = w2_ref[...]
    z = jnp.dot(x, w1_ref[...], preferred_element_type=jnp.float32) + b1_ref[...]
    s = jax.nn.sigmoid(z)
    h = z * s                                                   # SiLU
    e_ref[...] = jnp.sum(h * w2, axis=-1, keepdims=True) + b2_ref[...]
    dsilu = s * (1.0 + z * (1.0 - s))                           # d SiLU / dz
    gz = w2 * dsilu                                             # [TN,H]
    gx_ref[...] = jnp.dot(gz, w1t_ref[...], preferred_element_type=jnp.float32)


def _virial_kernel(eidx_ref, eg_ref, vec_ref, out_ref, acc_ref):
    # eidx:[2,TE] int32   eg:[TE,3]   vec:[TE,3]   out:[TN,9]   acc:[TN,9] f32
    # grid = (N/TN, E/TE), E axis is the ("arbitrary") reduction axis.
    i = pl.program_id(0)
    j = pl.program_id(1)
    tn = out_ref.shape[0]
    te = eg_ref.shape[0]

    @pl.when(j == 0)
    def _():
        acc_ref[...] = jnp.zeros_like(acc_ref)

    # Unscaled {0,1,2} one-hot mask for this (node-tile, edge-tile) pair;
    # the 0.5 edge weight is applied once on the [TN,9] result instead.
    node_ids = i * tn + jax.lax.broadcasted_iota(jnp.int32, (tn, te), 0)
    i0 = eidx_ref[0:1, :]                                       # [1,TE]
    i1 = eidx_ref[1:2, :]
    w = ((node_ids == i0).astype(jnp.float32)
         + (node_ids == i1).astype(jnp.float32))                # [TN,TE]

    eg = eg_ref[...]                                            # [TE,3]
    vec = vec_ref[...]                                          # [TE,3]
    # col9[:, 3k:3k+3] = eg[:,k] * vec  -> flattened outer product per edge.
    col9 = jnp.concatenate([eg[:, k:k + 1] * vec for k in range(3)],
                           axis=-1)                             # [TE,9]

    acc_ref[...] += jnp.dot(w, col9, preferred_element_type=jnp.float32)

    @pl.when(j == pl.num_programs(1) - 1)
    def _():
        out_ref[...] = 0.5 * acc_ref[...]


# ------------------------------ wrappers ------------------------------------

def mlp_fused_call(x, w1, w1t, b1_row, w2_row, b2_11, *, max_tile_n=1024):
    n, d = x.shape
    h = w1.shape[1]
    tn = _pick_sublane_tile(n, max_tile_n)
    grid = (n // tn,)

    def const_spec(shape):
        return pl.BlockSpec(shape, lambda i: (0, 0))

    e, gx = pl.pallas_call(
        _mlp_fused_kernel,
        out_shape=(jax.ShapeDtypeStruct((n, 1), jnp.float32),
                   jax.ShapeDtypeStruct((n, d), jnp.float32)),
        grid_spec=pltpu.PrefetchScalarGridSpec(
            num_scalar_prefetch=0,
            grid=grid,
            in_specs=[pl.BlockSpec((tn, d), lambda i: (i, 0)),
                      const_spec((d, h)),
                      const_spec((h, d)),
                      const_spec((1, h)),
                      const_spec((1, h)),
                      const_spec((1, 1))],
            out_specs=[pl.BlockSpec((tn, 1), lambda i: (i, 0)),
                       pl.BlockSpec((tn, d), lambda i: (i, 0))]),
        compiler_params=pltpu.CompilerParams(
            dimension_semantics=("parallel",),
            vmem_limit_bytes=32 * 1024 * 1024),
    )(x, w1, w1t, b1_row, w2_row, b2_11)
    return e, gx


def virial_call(edge_index, edge_grad, vec, n_atom, *,
                max_tile_n=512, max_tile_e=1024):
    n_edge = vec.shape[0]
    tn = _pick_sublane_tile(n_atom, max_tile_n)
    te = _pick_lane_tile(n_edge, max_tile_e)
    grid = (n_atom // tn, n_edge // te)

    out = pl.pallas_call(
        _virial_kernel,
        out_shape=jax.ShapeDtypeStruct((n_atom, 9), jnp.float32),
        grid_spec=pltpu.PrefetchScalarGridSpec(
            num_scalar_prefetch=0,
            grid=grid,
            in_specs=[pl.BlockSpec((2, te), lambda i, j: (0, j)),
                      pl.BlockSpec((te, 3), lambda i, j: (j, 0)),
                      pl.BlockSpec((te, 3), lambda i, j: (j, 0))],
            out_specs=pl.BlockSpec((tn, 9), lambda i, j: (i, 0)),
            scratch_shapes=[pltpu.VMEM((tn, 9), jnp.float32)]),
        compiler_params=pltpu.CompilerParams(
            dimension_semantics=("parallel", "arbitrary"),
            vmem_limit_bytes=48 * 1024 * 1024),
    )(edge_index, edge_grad, vec)
    return out.reshape(n_atom, 3, 3)


# TODO(synk): in the real model x_scalar is produced from (coord, vec) by the
# upstream GNN, which lives outside this module; a small synthetic
# differentiable upstream is used so that the coord/vec gradients exist.
def synthetic_upstream(coord, vec, edge_index, a_proj, b_proj):
    node_feat = jnp.tanh(coord @ a_proj)                        # [N, node_dim]
    msg = jnp.tanh(vec @ b_proj)                                # [E, node_dim]
    node_feat = node_feat.at[edge_index[0]].add(msg)
    node_feat = node_feat.at[edge_index[1]].add(msg)
    return node_feat


def md_grad_out(coord, vec, edge_index, params, upstream_params):
    """Forward semantics of MDGradOut: (energies, forces, virials)."""
    w1, w1t, b1_row, w2_row, b2_11 = params

    # Upstream GNN stays in plain JAX; its VJP pulls the Pallas-computed
    # d(sum E)/dx_scalar back to (coord, vec).
    x_scalar, upstream_vjp = jax.vjp(
        lambda c, v: synthetic_upstream(c, v, edge_index, *upstream_params),
        coord, vec)

    e, gx = mlp_fused_call(x_scalar, w1, w1t, b1_row, w2_row, b2_11)
    energies = e.reshape(-1)

    nuc_grad, edge_grad = upstream_vjp(gx)
    forces = -nuc_grad
    virials = virial_call(edge_index, edge_grad, vec, coord.shape[0])
    return energies, forces, virials


# --------------------------- reference (plain JAX) --------------------------

def reference(coord, vec, edge_index, params, upstream_params):
    w1, _, b1_row, w2_row, b2_11 = params

    def energy_fn(coord_, vec_):
        x = synthetic_upstream(coord_, vec_, edge_index, *upstream_params)
        z = jnp.dot(x, w1, precision=jax.lax.Precision.HIGHEST) + b1_row
        h = z * jax.nn.sigmoid(z)
        e = jnp.sum(h * w2_row, axis=-1) + b2_11[0, 0]
        return jnp.sum(e), e

    (_, energies), (nuc_grad, edge_grad) = jax.value_and_grad(
        energy_fn, argnums=(0, 1), has_aux=True)(coord, vec)
    forces = -nuc_grad
    edge_virials = jnp.einsum('zi,zj->zij', edge_grad, vec)
    virials = jnp.zeros((coord.shape[0], 3, 3), jnp.float32)
    virials = virials.at[edge_index[0]].add(edge_virials / 2)
    virials = virials.at[edge_index[1]].add(edge_virials / 2)
    return energies, forces, virials


# --------------------------------- main --------------------------------------

if __name__ == "__main__":
    key = jax.random.PRNGKey(0)
    k_w1, k_b1, k_w2, k_b2, k_a, k_b, k_c, k_v = jax.random.split(key, 8)

    N, E = 8, 16

    # out_mlp parameters (deterministic, Linear-like init)
    lim1 = 1.0 / np.sqrt(NODE_DIM)
    w1 = jax.random.uniform(k_w1, (NODE_DIM, HIDDEN_DIM), jnp.float32, -lim1, lim1)
    b1_row = jax.random.uniform(k_b1, (1, HIDDEN_DIM), jnp.float32, -lim1, lim1)
    lim2 = 1.0 / np.sqrt(HIDDEN_DIM)
    w2_row = jax.random.uniform(k_w2, (1, HIDDEN_DIM), jnp.float32, -lim2, lim2)
    b2_11 = jax.random.uniform(k_b2, (1, 1), jnp.float32, -lim2, lim2)
    params = (w1, jnp.transpose(w1), b1_row, w2_row, b2_11)

    # synthetic upstream projections
    a_proj = 0.1 * jax.random.normal(k_a, (3, NODE_DIM), jnp.float32)
    b_proj = 0.1 * jax.random.normal(k_b, (3, NODE_DIM), jnp.float32)
    upstream_params = (a_proj, b_proj)

    # inputs
    coord = jax.random.normal(k_c, (N, 3), jnp.float32)
    vec = jax.random.normal(k_v, (E, 3), jnp.float32)
    src = (np.arange(E) % N).astype(np.int32)
    dst = ((np.arange(E) * 3 + 1) % N).astype(np.int32)
    edge_index = jnp.asarray(np.stack([src, dst], axis=0))      # [2, E] int32

    fn = jax.jit(md_grad_out)
    energies, forces, virials = fn(coord, vec, edge_index, params, upstream_params)
    jax.block_until_ready((energies, forces, virials))

    # sanity check against plain-JAX reference (f32 everywhere -> tight tol)
    e_ref, f_ref, v_ref = reference(coord, vec, edge_index, params, upstream_params)
    np.testing.assert_allclose(np.asarray(energies), np.asarray(e_ref), rtol=1e-3, atol=1e-5)
    np.testing.assert_allclose(np.asarray(forces), np.asarray(f_ref), rtol=1e-3, atol=1e-5)
    np.testing.assert_allclose(np.asarray(virials), np.asarray(v_ref), rtol=1e-3, atol=1e-5)

    assert energies.shape == (N,) and forces.shape == (N, 3) and virials.shape == (N, 3, 3)
    print("KERNEL_OK")
</pallas_src>

<mosaic_0001>
module attributes {stable_mosaic.version = 11 : i64} {
  func.func @_virial_kernel(%arg0: i32, %arg1: i32, %arg2: memref<2x16xi32, #tpu.memory_space<vmem>>, %arg3: memref<16x3xf32, #tpu.memory_space<vmem>>, %arg4: memref<16x3xf32, #tpu.memory_space<vmem>>, %arg5: memref<8x9xf32, #tpu.memory_space<vmem>>, %arg6: memref<8x9xf32, #tpu.memory_space<vmem>>) attributes {dimension_semantics = [#tpu.dimension_semantics<parallel>, #tpu.dimension_semantics<arbitrary>], iteration_bounds = array<i64: 1, 1>, scalar_prefetch = 0 : i64, scratch_operands = 1 : i64, tpu.core_type = #tpu.core_type<tc>, window_params = [{transform_indices = @transform_0, window_bounds = array<i64: 2, 16>}, {transform_indices = @transform_1, window_bounds = array<i64: 16, 3>}, {transform_indices = @transform_2, window_bounds = array<i64: 16, 3>}, {transform_indices = @transform_3, window_bounds = array<i64: 8, 9>}]} {
    %c0_i32 = arith.constant 0 : i32
    %0 = arith.cmpi eq, %arg1, %c0_i32 : i32
    %1 = arith.extui %0 : i1 to i32
    %c0_i32_0 = arith.constant 0 : i32
    %2 = arith.cmpi ne, %1, %c0_i32_0 : i32
    scf.if %2 {
      %cst_13 = arith.constant 0.000000e+00 : f32
      %37 = vector.broadcast %cst_13 : f32 to vector<8x9xf32>
      %c0_14 = arith.constant 0 : index
      %c0_15 = arith.constant 0 : index
      %38 = vector.load %arg6[%c0_14, %c0_15] : memref<8x9xf32, #tpu.memory_space<vmem>>, vector<8x9xf32>
      tpu.vector_store %arg6[%c0_14, %c0_15], %37 {strides = array<i32>} : memref<8x9xf32, #tpu.memory_space<vmem>>, vector<8x9xf32>,
    } else {
    }
    %c8_i32 = arith.constant 8 : i32
    %3 = arith.muli %arg0, %c8_i32 : i32
    %4 = tpu.iota {dimensions = array<i32: 0>} : vector<8x16xi32>
    %5 = vector.broadcast %3 : i32 to vector<8x16xi32>
    %6 = arith.addi %5, %4 : vector<8x16xi32>
    %c0 = arith.constant 0 : index
    %c0_1 = arith.constant 0 : index
    %7 = vector.load %arg2[%c0, %c0_1] : memref<2x16xi32, #tpu.memory_space<vmem>>, vector<1x16xi32>
    %c1 = arith.constant 1 : index
    %c0_2 = arith.constant 0 : index
    %8 = vector.load %arg2[%c1, %c0_2] : memref<2x16xi32, #tpu.memory_space<vmem>>, vector<1x16xi32>
    %9 = vector.broadcast %7 : vector<1x16xi32> to vector<8x16xi32>
    %10 = arith.cmpi eq, %6, %9 : vector<8x16xi32>
    %11 = arith.extui %10 : vector<8x16xi1> to vector<8x16xi32>
    %12 = arith.sitofp %11 : vector<8x16xi32> to vector<8x16xf32>
    %13 = vector.broadcast %8 : vector<1x16xi32> to vector<8x16xi32>
    %14 = arith.cmpi eq, %6, %13 : vector<8x16xi32>
    %15 = arith.extui %14 : vector<8x16xi1> to vector<8x16xi32>
    %16 = arith.sitofp %15 : vector<8x16xi32> to vector<8x16xf32>
    %17 = arith.addf %12, %16 : vector<8x16xf32>
    %c0_3 = arith.constant 0 : index
    %c0_4 = arith.constant 0 : index
    %18 = vector.load %arg3[%c0_3, %c0_4] : memref<16x3xf32, #tpu.memory_space<vmem>>, vector<16x3xf32>
    %c0_5 = arith.constant 0 : index
    %c0_6 = arith.constant 0 : index
    %19 = vector.load %arg4[%c0_5, %c0_6] : memref<16x3xf32, #tpu.memory_space<vmem>>, vector<16x3xf32>
    %20 = vector.extract_strided_slice %18 {offsets = [0, 0], sizes = [16, 1], strides = [1, 1]} : vector<16x3xf32> to vector<16x1xf32>
    %21 = vector.broadcast %20 : vector<16x1xf32> to vector<16x3xf32>
    %22 = arith.mulf %21, %19 : vector<16x3xf32>
    %23 = vector.extract_strided_slice %18 {offsets = [0, 1], sizes = [16, 1], strides = [1, 1]} : vector<16x3xf32> to vector<16x1xf32>
    %24 = vector.broadcast %23 : vector<16x1xf32> to vector<16x3xf32>
    %25 = arith.mulf %24, %19 : vector<16x3xf32>
    %26 = vector.extract_strided_slice %18 {offsets = [0, 2], sizes = [16, 1], strides = [1, 1]} : vector<16x3xf32> to vector<16x1xf32>
    %27 = vector.broadcast %26 : vector<16x1xf32> to vector<16x3xf32>
    %28 = arith.mulf %27, %19 : vector<16x3xf32>
    %29 = tpu.concatenate %22, %25, %28 in 1 : vector<16x3xf32>, vector<16x3xf32>, vector<16x3xf32> -> vector<16x9xf32>
    %c0_7 = arith.constant 0 : index
    %c0_8 = arith.constant 0 : index
    %30 = vector.load %arg6[%c0_7, %c0_8] : memref<8x9xf32, #tpu.memory_space<vmem>>, vector<8x9xf32>
    %cst = arith.constant dense<0.000000e+00> : vector<8x9xf32>
    %31 = tpu.matmul %17, %29, %cst {dimension_numbers = #tpu.dot_dimension_numbers<[1], [0], [0], [1], [0, 0, 1, 1], [], []>} : vector<8x16xf32>, vector<16x9xf32>, vector<8x9xf32> -> vector<8x9xf32>
    %32 = arith.addf %30, %31 : vector<8x9xf32>
    %c0_9 = arith.constant 0 : index
    %c0_10 = arith.constant 0 : index
    %33 = vector.load %arg6[%c0_9, %c0_10] : memref<8x9xf32, #tpu.memory_space<vmem>>, vector<8x9xf32>
    tpu.vector_store %arg6[%c0_9, %c0_10], %32 {strides = array<i32>} : memref<8x9xf32, #tpu.memory_space<vmem>>, vector<8x9xf32>,
    %c0_i32_11 = arith.constant 0 : i32
    %34 = arith.cmpi eq, %arg1, %c0_i32_11 : i32
    %35 = arith.extui %34 : i1 to i32
    %c0_i32_12 = arith.constant 0 : i32
    %36 = arith.cmpi ne, %35, %c0_i32_12 : i32
    scf.if %36 {
      %c0_13 = arith.constant 0 : index
      %c0_14 = arith.constant 0 : index
      %37 = vector.load %arg6[%c0_13, %c0_14] : memref<8x9xf32, #tpu.memory_space<vmem>>, vector<8x9xf32>
      %cst_15 = arith.constant 5.000000e-01 : f32
      %38 = vector.broadcast %cst_15 : f32 to vector<8x9xf32>
      %39 = arith.mulf %38, %37 : vector<8x9xf32>
      %c0_16 = arith.constant 0 : index
      %c0_17 = arith.constant 0 : index
      %40 = vector.load %arg5[%c0_16, %c0_17] : memref<8x9xf32, #tpu.memory_space<vmem>>, vector<8x9xf32>
      tpu.vector_store %arg5[%c0_16, %c0_17], %39 {strides = array<i32>} : memref<8x9xf32, #tpu.memory_space<vmem>>, vector<8x9xf32>,
    } else {
    }
    return
  }
  func.func @transform_0(%arg0: i32, %arg1: i32) -> (i32, i32) {
    %c0_i32 = arith.constant 0 : i32
    %c0_i32_0 = arith.constant 0 : i32
    return %c0_i32, %arg1 : i32, i32
  }
  func.func @transform_1(%arg0: i32, %arg1: i32) -> (i32, i32) {
    %c0_i32 = arith.constant 0 : i32
    %c0_i32_0 = arith.constant 0 : i32
    return %arg1, %c0_i32 : i32, i32
  }
  func.func @transform_2(%arg0: i32, %arg1: i32) -> (i32, i32) {
    %c0_i32 = arith.constant 0 : i32
    %c0_i32_0 = arith.constant 0 : i32
    return %arg1, %c0_i32 : i32, i32
  }
  func.func @transform_3(%arg0: i32, %arg1: i32) -> (i32, i32) {
    %c0_i32 = arith.constant 0 : i32
    %c0_i32_0 = arith.constant 0 : i32
    return %arg0, %c0_i32 : i32, i32
  }
}

module attributes {stable_mosaic.version = 11 : i64} {
  func.func @_mlp_fused_kernel(%arg0: i32, %arg1: memref<8x32xf32, #tpu.memory_space<vmem>>, %arg2: memref<32x16xf32, #tpu.memory_space<vmem>>, %arg3: memref<16x32xf32, #tpu.memory_space<vmem>>, %arg4: memref<1x16xf32, #tpu.memory_space<vmem>>, %arg5: memref<1x16xf32, #tpu.memory_space<vmem>>, %arg6: memref<1x1xf32, #tpu.memory_space<vmem>>, %arg7: memref<8x1xf32, #tpu.memory_space<vmem>>, %arg8: memref<8x32xf32, #tpu.memory_space<vmem>>) attributes {dimension_semantics = [#tpu.dimension_semantics<parallel>], iteration_bounds = array<i64: 1>, scalar_prefetch = 0 : i64, scratch_operands = 0 : i64, tpu.core_type = #tpu.core_type<tc>, window_params = [{transform_indices = @transform_0, window_bounds = array<i64: 8, 32>}, {pipeline_mode = #tpu.pipeline_mode<synchronous>, transform_indices = @transform_1, window_bounds = array<i64: 32, 16>}, {pipeline_mode = #tpu.pipeline_mode<synchronous>, transform_indices = @transform_2, window_bounds = array<i64: 16, 32>}, {pipeline_mode = #tpu.pipeline_mode<synchronous>, transform_indices = @transform_3, window_bounds = array<i64: 1, 16>}, {pipeline_mode = #tpu.pipeline_mode<synchronous>, transform_indices = @transform_4, window_bounds = array<i64: 1, 16>}, {pipeline_mode = #tpu.pipeline_mode<synchronous>, transform_indices = @transform_5, window_bounds = array<i64: 1, 1>}, {transform_indices = @transform_6, window_bounds = array<i64: 8, 1>}, {transform_indices = @transform_7, window_bounds = array<i64: 8, 32>}]} {
    %c0 = arith.constant 0 : index
    %c0_0 = arith.constant 0 : index
    %0 = vector.load %arg1[%c0, %c0_0] : memref<8x32xf32, #tpu.memory_space<vmem>>, vector<8x32xf32>
    %c0_1 = arith.constant 0 : index
    %c0_2 = arith.constant 0 : index
    %1 = vector.load %arg5[%c0_1, %c0_2] : memref<1x16xf32, #tpu.memory_space<vmem>>, vector<1x16xf32>
    %c0_3 = arith.constant 0 : index
    %c0_4 = arith.constant 0 : index
    %2 = vector.load %arg2[%c0_3, %c0_4] : memref<32x16xf32, #tpu.memory_space<vmem>>, vector<32x16xf32>
    %cst = arith.constant dense<0.000000e+00> : vector<8x16xf32>
    %3 = tpu.matmul %0, %2, %cst {dimension_numbers = #tpu.dot_dimension_numbers<[1], [0], [0], [1], [0, 0, 1, 1], [], []>} : vector<8x32xf32>, vector<32x16xf32>, vector<8x16xf32> -> vector<8x16xf32>
    %c0_5 = arith.constant 0 : index
    %c0_6 = arith.constant 0 : index
    %4 = vector.load %arg4[%c0_5, %c0_6] : memref<1x16xf32, #tpu.memory_space<vmem>>, vector<1x16xf32>
    %5 = vector.broadcast %4 : vector<1x16xf32> to vector<8x16xf32>
    %6 = arith.addf %3, %5 : vector<8x16xf32>
    %7 = arith.negf %6 : vector<8x16xf32>
    %8 = math.exp %7 : vector<8x16xf32>
    %cst_7 = arith.constant 1.000000e+00 : f32
    %9 = vector.broadcast %cst_7 : f32 to vector<8x16xf32>
    %10 = arith.addf %9, %8 : vector<8x16xf32>
    %11 = arith.divf %9, %10 : vector<8x16xf32>
    %12 = arith.mulf %6, %11 : vector<8x16xf32>
    %13 = vector.broadcast %1 : vector<1x16xf32> to vector<8x16xf32>
    %14 = arith.mulf %12, %13 : vector<8x16xf32>
    %cst_8 = arith.constant dense<0.000000e+00> : vector<8xf32>
    %15 = vector.multi_reduction <add>, %14, %cst_8 [1] : vector<8x16xf32> to vector<8xf32>
    %16 = vector.shape_cast %15 : vector<8xf32> to vector<8x1xf32>
    %c0_9 = arith.constant 0 : index
    %c0_10 = arith.constant 0 : index
    %17 = vector.load %arg6[%c0_9, %c0_10] : memref<1x1xf32, #tpu.memory_space<vmem>>, vector<1x1xf32>
    %18 = vector.broadcast %17 : vector<1x1xf32> to vector<8x1xf32>
    %19 = arith.addf %16, %18 : vector<8x1xf32>
    %c0_11 = arith.constant 0 : index
    %c0_12 = arith.constant 0 : index
    %20 = vector.load %arg7[%c0_11, %c0_12] : memref<8x1xf32, #tpu.memory_space<vmem>>, vector<8x1xf32>
    tpu.vector_store %arg7[%c0_11, %c0_12], %19 {strides = array<i32>} : memref<8x1xf32, #tpu.memory_space<vmem>>, vector<8x1xf32>,
    %cst_13 = arith.constant 1.000000e+00 : f32
    %21 = vector.broadcast %cst_13 : f32 to vector<8x16xf32>
    %22 = arith.subf %21, %11 : vector<8x16xf32>
    %23 = arith.mulf %6, %22 : vector<8x16xf32>
    %cst_14 = arith.constant 1.000000e+00 : f32
    %24 = vector.broadcast %cst_14 : f32 to vector<8x16xf32>
    %25 = arith.addf %24, %23 : vector<8x16xf32>
    %26 = arith.mulf %11, %25 : vector<8x16xf32>
    %27 = vector.broadcast %1 : vector<1x16xf32> to vector<8x16xf32>
    %28 = arith.mulf %27, %26 : vector<8x16xf32>
    %c0_15 = arith.constant 0 : index
    %c0_16 = arith.constant 0 : index
    %29 = vector.load %arg3[%c0_15, %c0_16] : memref<16x32xf32, #tpu.memory_space<vmem>>, vector<16x32xf32>
    %cst_17 = arith.constant dense<0.000000e+00> : vector<8x32xf32>
    %30 = tpu.matmul %28, %29, %cst_17 {dimension_numbers = #tpu.dot_dimension_numbers<[1], [0], [0], [1], [0, 0, 1, 1], [], []>} : vector<8x16xf32>, vector<16x32xf32>, vector<8x32xf32> -> vector<8x32xf32>
    %c0_18 = arith.constant 0 : index
    %c0_19 = arith.constant 0 : index
    %31 = vector.load %arg8[%c0_18, %c0_19] : memref<8x32xf32, #tpu.memory_space<vmem>>, vector<8x32xf32>
    tpu.vector_store %arg8[%c0_18, %c0_19], %30 {strides = array<i32>} : memref<8x32xf32, #tpu.memory_space<vmem>>, vector<8x32xf32>,
    return
  }
  func.func @transform_0(%arg0: i32) -> (i32, i32) {
    %c0_i32 = arith.constant 0 : i32
    %c0_i32_0 = arith.constant 0 : i32
    return %arg0, %c0_i32 : i32, i32
  }
  func.func @transform_1(%arg0: i32) -> (i32, i32) {
    %c0_i32 = arith.constant 0 : i32
    %c0_i32_0 = arith.constant 0 : i32
    %c0_i32_1 = arith.constant 0 : i32
    return %c0_i32, %c0_i32_0 : i32, i32
  }
  func.func @transform_2(%arg0: i32) -> (i32, i32) {
    %c0_i32 = arith.constant 0 : i32
    %c0_i32_0 = arith.constant 0 : i32
    %c0_i32_1 = arith.constant 0 : i32
    return %c0_i32, %c0_i32_0 : i32, i32
  }
  func.func @transform_3(%arg0: i32) -> (i32, i32) {
    %c0_i32 = arith.constant 0 : i32
    %c0_i32_0 = arith.constant 0 : i32
    %c0_i32_1 = arith.constant 0 : i32
    return %c0_i32, %c0_i32_0 : i32, i32
  }
  func.func @transform_4(%arg0: i32) -> (i32, i32) {
    %c0_i32 = arith.constant 0 : i32
    %c0_i32_0 = arith.constant 0 : i32
    %c0_i32_1 = arith.constant 0 : i32
    return %c0_i32, %c0_i32_0 : i32, i32
  }
  func.func @transform_5(%arg0: i32) -> (i32, i32) {
    %c0_i32 = arith.constant 0 : i32
    %c0_i32_0 = arith.constant 0 : i32
    %c0_i32_1 = arith.constant 0 : i32
    return %c0_i32, %c0_i32_0 : i32, i32
  }
  func.func @transform_6(%arg0: i32) -> (i32, i32) {
    %c0_i32 = arith.constant 0 : i32
    %c0_i32_0 = arith.constant 0 : i32
    return %arg0, %c0_i32 : i32, i32
  }
  func.func @transform_7(%arg0: i32) -> (i32, i32) {
    %c0_i32 = arith.constant 0 : i32
    %c0_i32_0 = arith.constant 0 : i32
    return %arg0, %c0_i32 : i32, i32
  }
}

</mosaic_0001>

<llo_original>
// kernel: md_grad_out.2
$region0: #{md_grad_out.2}
  #allocation0 [shape = 'u32[]', space=smem, size = 0x4, offset = 0x4, fixed_abs, tag = 'smem constant byte address 0x4 - core index']
  #allocation1 [shape = 'u32[144,128]{1,0:T(1,128)}', space=vmem, size = 0x12000, scoped, tag = 'internal scratch']
  #allocation2 [shape = 'f32[1,1]{1,0:T(1,128)S(1)}', space=vmem, size = 0x200, scoped, tag = 'scoped memory for md_grad_out.2']
  %s0 = inlined_call_operand.vmem [shape: f32[8,32], index: 0, kind: input, shape index: {}]
  %s1 = inlined_call_operand.vmem [shape: f32[32,16], index: 1, kind: input, shape index: {}]
  %s2 = inlined_call_operand.vmem [shape: f32[16,32], index: 2, kind: input, shape index: {}]
  %s3 = inlined_call_operand.vmem [shape: f32[1,16], index: 3, kind: input, shape index: {}]
  %s4 = inlined_call_operand.vmem [shape: f32[1,16], index: 4, kind: input, shape index: {}]
  %s5 = inlined_call_operand.<no memory space> [shape: f32[1,1], index: 5, kind: input, shape index: {}]
  %s6 = inlined_call_operand.vmem [shape: f32[8,1], index: 6, kind: output, shape index: {0}]
  %s7 = inlined_call_operand.vmem [shape: f32[8,32], index: 7, kind: output, shape index: {1}]
  %8 = xla_tuple %s6, %s7
  %s9 = sld [smem:[#allocation0]]
  $region42: #{md_grad_out.2} parent=0
    _
  %s11 = ssub.s32 1, %s9
  %s12 = scalar_select 0, %s11, %s9
  %v13 = vstv %s5
  %14 = vst [vmem:[#allocation2] sm:$0x1] %v13
  // Predicated region
  $region2: #{md_grad_out.2} parent=0 // pred_check
    _
  $region3: #{md_grad_out.2} parent=0 // pred_check_branch
    %16 = sbr.rel (0) target = $region5
  $region4: #{md_grad_out.2} parent=0 // pred_region
    _
  $region5: #{md_grad_out.2} parent=0 // pred_fallthru
    _
  // Predicated region
  $region6: #{md_grad_out.2} parent=0 // pred_check
    _
  $region7: #{md_grad_out.2} parent=0 // pred_check_branch
    %18 = sbr.rel (0) target = $region9
  $region8: #{md_grad_out.2} parent=0 // pred_region
    _
  $region9: #{md_grad_out.2} parent=0 // pred_fallthru
    _
  // Predicated region
  $region10: #{md_grad_out.2} parent=0 // pred_check
    _
  $region11: #{md_grad_out.2} parent=0 // pred_check_branch
    %20 = sbr.rel (0) target = $region13
  $region12: #{md_grad_out.2} parent=0 // pred_region
    _
  $region13: #{md_grad_out.2} parent=0 // pred_fallthru
    _
  // Predicated region
  $region14: #{md_grad_out.2} parent=0 // pred_check
    _
  $region15: #{md_grad_out.2} parent=0 // pred_check_branch
    %22 = sbr.rel (0) target = $region17
  $region16: #{md_grad_out.2} parent=0 // pred_region
    _
  $region17: #{md_grad_out.2} parent=0 // pred_fallthru
    _
  // Predicated region
  $region18: #{md_grad_out.2} parent=0 // pred_check
    _
  $region19: #{md_grad_out.2} parent=0 // pred_check_branch
    %24 = sbr.rel (0) target = $region21
  $region20: #{md_grad_out.2} parent=0 // pred_region
    _
  $region21: #{md_grad_out.2} parent=0 // pred_fallthru
    _
  // Predicated region
  $region22: #{md_grad_out.2} parent=0 // pred_check
    _
  $region23: #{md_grad_out.2} parent=0 // pred_check_branch
    %26 = sbr.rel (0) target = $region25
  $region24: #{md_grad_out.2} parent=0 // pred_region
    _
  $region25: #{md_grad_out.2} parent=0 // pred_fallthru
    _
  %v27 = vld [vmem:[%s0] sm:$0xff]
  %v28 = vld [vmem:[%s4] sm:$0x1]
  %v29 = vld [vmem:[%s1] sm:$0xff]
  %v30 = vld [vmem:[%s1 + $0x8] sm:$0xff]
  %v31 = vld [vmem:[%s1 + $0x10] sm:$0xff]
  %v32 = vld [vmem:[%s1 + $0x18] sm:$0xff]
  %v33 = vld [vmem:[%s3] sm:$0x1]
  %v35 = vlaneseq
  %v36 = vshrl.u32 %v35, 7
  %v37 = vsub.s32 0, %v36
  %v38 = vrot.slane %v33, %v37
  %vm40 = vcmask 261120
  %v42 = vsel %vm40, %v27, 0
  %44 = vmatprep.subr.mxu0 0.0
  %45 = vmatpush1.msra.mxu0 %v29
  %46 = vmatprep.subr.mxu0 0.0
  %47 = vmatpush1.msra.mxu0 %v30
  %48 = vmatprep.subr.mxu0 0.0
  %49 = vmatpush1.msra.mxu0 %v31
  %50 = vmatprep.subr.mxu0 0.0
  %51 = vmatpush1.msra.mxu0 %v32
  %52 = vmatprep.subr.mxu0 0.0
  %53 = vmatpush1.msra.mxu0 0.0
  %54 = vmatprep.subr.mxu0 0.0
  %55 = vmatpush1.msra.mxu0 0.0
  %56 = vmatprep.subr.mxu0 0.0
  %57 = vmatpush1.msra.mxu0 0.0
  %58 = vmatprep.subr.mxu0 0.0
  %59 = vmatpush1.msra.mxu0 0.0
  %60 = vmatprep.subr.mxu0 0.0
  %61 = vmatpush1.msra.mxu0 0.0
  %62 = vmatprep.subr.mxu0 0.0
  %63 = vmatpush1.msra.mxu0 0.0
  %64 = vmatprep.subr.mxu0 0.0
  %65 = vmatpush1.msra.mxu0 0.0
  %66 = vmatprep.subr.mxu0 0.0
  %67 = vmatpush1.msra.mxu0 0.0
  %68 = vmatprep.subr.mxu0 0.0
  %69 = vmatpush1.msra.mxu0 0.0
  %70 = vmatprep.subr.mxu0 0.0
  %71 = vmatpush1.msra.mxu0 0.0
  %72 = vmatprep.subr.mxu0 0.0
  %73 = vmatpush1.msra.mxu0 0.0
  %74 = vmatprep.subr.mxu0 0.0
  %75 = vmatpush1.msra.mxu0 0.0
  %76 = vmatprep.subr.mxu0 0.0
  %77 = vmatpush1.msra.mxu0 0.0
  %78 = vmatprep.subr.mxu0 0.0
  %79 = vmatpush1.msra.mxu0 0.0
  %80 = vmatprep.subr.mxu0 0.0
  %81 = vmatpush1.msra.mxu0 0.0
  %82 = vmatprep.subr.mxu0 0.0
  %83 = vmatpush1.msra.mxu0 0.0
  %84 = vmatprep.subr.mxu0 0.0
  %85 = vmatpush1.msra.mxu0 0.0
  %86 = vmatprep.subr.mxu0 0.0
  %87 = vmatpush1.msra.mxu0 0.0
  %88 = vmatprep.subr.mxu0 0.0
  %89 = vmatpush1.msra.mxu0 0.0
  %90 = vmatprep.subr.mxu0 0.0
  %91 = vmatpush1.msra.mxu0 0.0
  %92 = vmatprep.subr.mxu0 0.0
  %93 = vmatpush1.msra.mxu0 0.0
  %94 = vmatprep.subr.mxu0 0.0
  %95 = vmatpush1.msra.mxu0 0.0
  %96 = vmatprep.subr.mxu0 0.0
  %97 = vmatpush1.msra.mxu0 0.0
  %98 = vmatprep.subr.mxu0 0.0
  %99 = vmatpush1.msra.mxu0 0.0
  %100 = vmatprep.subr.mxu0 0.0
  %101 = vmatpush1.msra.mxu0 0.0
  %102 = vmatprep.subr.mxu0 0.0
  %103 = vmatpush1.msra.mxu0 0.0
  %104 = vmatprep.subr.mxu0 0.0
  %105 = vmatpush1.msra.mxu0 0.0
  %106 = vmatprep.subr.mxu0 0.0
  %107 = vmatpush1.msra.mxu0 0.0
  %108 = vmatprep.mubr.f32.mxu0 0.0
  %109 = vmatmul.mubr.f32.gmra.mrb[0].mxu0 %v42
  %v110 = vpop.f32.mrb[0].mxu0
  %v111 = vadd.f32 %v38, %v110
  %v112 = vpop.f32.mrb[0].mxu0
  %113 = vdwg.mxu0
  %v114 = vxor.u32 %v111, 2147483648
  %v115 = vmul.f32 %v114, 1.442695
  %v116 = vpow.pop %v115
  %v117 = vadd.f32 %v116, 1.0
  %v118 = vrcp.pop %v117
  %v119 = vmul.f32 1.0, %v118
  %v120 = vmul.f32 %v111, %v119
  %v122 = vlaneseq
  %v123 = vshrl.u32 %v122, 7
  %v124 = vsub.s32 0, %v123
  %v125 = vrot.slane %v28, %v124
  %v127 = vmul.f32 %v120, %v125
  %vm128 = vcmask 130048
  %v129 = vsel %vm128, %v127, 0.0
  %130 = vadd.xlane.f32.xlu0 %v129
  %v131 = vpop.xlane.xlu0 %130
  %v132 = vld [vmem:[#allocation2] sm:$0x1]
  %v134 = vlaneseq
  %v135 = vshrl.u32 %v134, 7
  %v136 = vsub.s32 0, %v135
  %v137 = vrot.slane %v132, %v136
  %v139 = vadd.f32 %v131, %v137
  %vm140 = vcmask 7168
  %141 = vst.msk [vmem:[%s6] sm:$0xff] %vm140, %v139
  %v142 = vsub.f32 1.0, %v119
  %v143 = vmul.f32 %v111, %v142
  %v144 = vadd.f32 %v143, 1.0
  %v145 = vmul.f32 %v119, %v144
  %v146 = vmul.f32 %v125, %v145
  %v147 = vld [vmem:[%s2] sm:$0xff]
  %v148 = vld [vmem:[%s2 + $0x8] sm:$0xff]
  %v150 = vsel %vm128, %v146, 0
  %152 = vmatprep.subr.mxu0 0.0
  %153 = vmatpush1.msra.mxu0 %v147
  %154 = vmatprep.subr.mxu0 0.0
  %155 = vmatpush1.msra.mxu0 %v148
  %156 = vmatprep.subr.mxu0 0.0
  %157 = vmatpush1.msra.mxu0 0.0
  %158 = vmatprep.subr.mxu0 0.0
  %159 = vmatpush1.msra.mxu0 0.0
  %160 = vmatprep.subr.mxu0 0.0
  %161 = vmatpush1.msra.mxu0 0.0
  %162 = vmatprep.subr.mxu0 0.0
  %163 = vmatpush1.msra.mxu0 0.0
  %164 = vmatprep.subr.mxu0 0.0
  %165 = vmatpush1.msra.mxu0 0.0
  %166 = vmatprep.subr.mxu0 0.0
  %167 = vmatpush1.msra.mxu0 0.0
  %168 = vmatprep.subr.mxu0 0.0
  %169 = vmatpush1.msra.mxu0 0.0
  %170 = vmatprep.subr.mxu0 0.0
  %171 = vmatpush1.msra.mxu0 0.0
  %172 = vmatprep.subr.mxu0 0.0
  %173 = vmatpush1.msra.mxu0 0.0
  %174 = vmatprep.subr.mxu0 0.0
  %175 = vmatpush1.msra.mxu0 0.0
  %176 = vmatprep.subr.mxu0 0.0
  %177 = vmatpush1.msra.mxu0 0.0
  %178 = vmatprep.subr.mxu0 0.0
  %179 = vmatpush1.msra.mxu0 0.0
  %180 = vmatprep.subr.mxu0 0.0
  %181 = vmatpush1.msra.mxu0 0.0
  %182 = vmatprep.subr.mxu0 0.0
  %183 = vmatpush1.msra.mxu0 0.0
  %184 = vmatprep.subr.mxu0 0.0
  %185 = vmatpush1.msra.mxu0 0.0
  %186 = vmatprep.subr.mxu0 0.0
  %187 = vmatpush1.msra.mxu0 0.0
  %188 = vmatprep.subr.mxu0 0.0
  %189 = vmatpush1.msra.mxu0 0.0
  %190 = vmatprep.subr.mxu0 0.0
  %191 = vmatpush1.msra.mxu0 0.0
  %192 = vmatprep.subr.mxu0 0.0
  %193 = vmatpush1.msra.mxu0 0.0
  %194 = vmatprep.subr.mxu0 0.0
  %195 = vmatpush1.msra.mxu0 0.0
  %196 = vmatprep.subr.mxu0 0.0
  %197 = vmatpush1.msra.mxu0 0.0
  %198 = vmatprep.subr.mxu0 0.0
  %199 = vmatpush1.msra.mxu0 0.0
  %200 = vmatprep.subr.mxu0 0.0
  %201 = vmatpush1.msra.mxu0 0.0
  %202 = vmatprep.subr.mxu0 0.0
  %203 = vmatpush1.msra.mxu0 0.0
  %204 = vmatprep.subr.mxu0 0.0
  %205 = vmatpush1.msra.mxu0 0.0
  %206 = vmatprep.subr.mxu0 0.0
  %207 = vmatpush1.msra.mxu0 0.0
  %208 = vmatprep.subr.mxu0 0.0
  %209 = vmatpush1.msra.mxu0 0.0
  %210 = vmatprep.subr.mxu0 0.0
  %211 = vmatpush1.msra.mxu0 0.0
  %212 = vmatprep.subr.mxu0 0.0
  %213 = vmatpush1.msra.mxu0 0.0
  %214 = vmatprep.subr.mxu0 0.0
  %215 = vmatpush1.msra.mxu0 0.0
  %216 = vmatprep.mubr.f32.mxu0 0.0
  %217 = vmatmul.mubr.f32.gmra.mrb[0].mxu0 %v150
  %v218 = vpop.f32.mrb[0].mxu0
  %v219 = vadd.f32 0.0, %v218
  %v220 = vpop.f32.mrb[0].mxu0
  %221 = vdwg.mxu0
  %222 = vst.msk [vmem:[%s7] sm:$0xff] %vm40, %v219
  // Predicated region
  $region26: #{md_grad_out.2} parent=0 // pred_check
    _
  $region27: #{md_grad_out.2} parent=0 // pred_check_branch
    %224 = sbr.rel (0) target = $region29
  $region28: #{md_grad_out.2} parent=0 // pred_region
    _
  $region29: #{md_grad_out.2} parent=0 // pred_fallthru
    _
  // Predicated region
  $region30: #{md_grad_out.2} parent=0 // pred_check
    _
  $region31: #{md_grad_out.2} parent=0 // pred_check_branch
    %226 = sbr.rel (0) target = $region33
  $region32: #{md_grad_out.2} parent=0 // pred_region
    _
  $region33: #{md_grad_out.2} parent=0 // pred_fallthru
    _
  // Predicated region
  $region34: #{md_grad_out.2} parent=0 // pred_check
    _
  $region35: #{md_grad_out.2} parent=0 // pred_check_branch
    %228 = sbr.rel (0) target = $region37
  $region36: #{md_grad_out.2} parent=0 // pred_region
    _
  $region37: #{md_grad_out.2} parent=0 // pred_fallthru
    _
  // Predicated region
  $region38: #{md_grad_out.2} parent=0 // pred_check
    _
  $region39: #{md_grad_out.2} parent=0 // pred_check_branch
    %230 = sbr.rel (0) target = $region41
  $region40: #{md_grad_out.2} parent=0 // pred_region
    _
  $region41: #{md_grad_out.2} parent=0 // pred_fallthru
    _

// kernel: md_grad_out.3
$region0: #{md_grad_out.3}
  #allocation0 [shape = 'u32[]', space=smem, size = 0x4, offset = 0x4, fixed_abs, tag = 'smem constant byte address 0x4 - core index']
  #allocation1 [shape = 'u32[144,128]{1,0:T(1,128)}', space=vmem, size = 0x12000, scoped, tag = 'internal scratch']
  #allocation2 [shape = 'f32[8,9]{1,0:T(8,128)}', space=vmem, size = 0x1000, scoped, tag = 'scratch operand']
  %s0 = inlined_call_operand.vmem [shape: s32[2,16], index: 0, kind: input, shape index: {}]
  %s1 = inlined_call_operand.vmem [shape: f32[16,3], index: 1, kind: input, shape index: {}]
  %s2 = inlined_call_operand.vmem [shape: f32[16,3], index: 2, kind: input, shape index: {}]
  %s3 = inlined_call_operand.vmem [shape: f32[8,9], index: 3, kind: output, shape index: {}]
  %s4 = sld [smem:[#allocation0]]
  $region30: #{md_grad_out.3} parent=0
    _
  %s6 = ssub.s32 1, %s4
  %s7 = scalar_select 0, %s6, %s4
  // Predicated region
  $region2: #{md_grad_out.3} parent=0 // pred_check
    _
  $region3: #{md_grad_out.3} parent=0 // pred_check_branch
    %9 = sbr.rel (0) target = $region5
  $region4: #{md_grad_out.3} parent=0 // pred_region
    _
  $region5: #{md_grad_out.3} parent=0 // pred_fallthru
    _
  // Predicated region
  $region6: #{md_grad_out.3} parent=0 // pred_check
    _
  $region7: #{md_grad_out.3} parent=0 // pred_check_branch
    %11 = sbr.rel (0) target = $region9
  $region8: #{md_grad_out.3} parent=0 // pred_region
    _
  $region9: #{md_grad_out.3} parent=0 // pred_fallthru
    _
  // Predicated region
  $region10: #{md_grad_out.3} parent=0 // pred_check
    _
  $region11: #{md_grad_out.3} parent=0 // pred_check_branch
    %13 = sbr.rel (0) target = $region13
  $region12: #{md_grad_out.3} parent=0 // pred_region
    _
  $region13: #{md_grad_out.3} parent=0 // pred_fallthru
    _
  %p14 = scmp.eq.s32.totalorder 0, 0
  // Predicated region
  $region14: #{md_grad_out.3} parent=0 // pred_check
    %p15 = pneg %p14
  $region15: #{md_grad_out.3} parent=0 // pred_check_branch
    %17 = sbr.rel (%p15) target = $region17
  $region16: #{md_grad_out.3} parent=0 // pred_region
    %vm18 = vcmask 72704
    %19 = vst.msk [vmem:[#allocation2] sm:$0xff] %vm18, 0.0
  $region17: #{md_grad_out.3} parent=0 // pred_fallthru
    _
  %s20 = smul.u32 0, 8
  %v21 = vlaneseq
  %v22 = vshrl.u32 %v21, 7
  %v23 = vstv %s20
  %v24 = vadd.s32 %v23, %v22
  %v25 = vld [vmem:[%s0] sm:$0x1]
  %v26 = vld [vmem:[%s0 + $0x1] sm:$0x1]
  %v27 = vlaneseq
  %v28 = vshrl.u32 %v27, 7
  %v29 = vsub.s32 0, %v28
  %v30 = vrot.slane %v25, %v29
  %vm31 = vcmp.eq.s32.totalorder %v24, %v30
  %v32 = vsel %vm31, 1, 0
  %v33 = vcvt.s32.f32 %v32
  %v34 = vlaneseq
  %v35 = vshrl.u32 %v34, 7
  %v36 = vsub.s32 0, %v35
  %v37 = vrot.slane %v26, %v36
  %vm38 = vcmp.eq.s32.totalorder %v24, %v37
  %v39 = vsel %vm38, 1, 0
  %v40 = vcvt.s32.f32 %v39
  %v41 = vadd.f32 %v33, %v40
  %v42 = vld [vmem:[%s1] sm:$0xff]
  %v43 = vld [vmem:[%s1 + $0x8] sm:$0xff]
  %v44 = vld [vmem:[%s2] sm:$0xff]
  %v45 = vld [vmem:[%s2 + $0x8] sm:$0xff]
  %47 = vset.pattern.permute.xlu0 0
  %48 = vperm.xlu0 %47, %v42
  %v49 = vpop.permute.xlu0 %48
  %52 = vset.pattern.permute.xlu0 0
  %53 = vperm.xlu0 %52, %v43
  %v54 = vpop.permute.xlu0 %53
  %v56 = vmul.f32 %v49, %v44
  %v57 = vmul.f32 %v54, %v45
  %58 = vset.pattern.permute.xlu0 1
  %59 = vperm.xlu0 %58, %v42
  %v60 = vpop.permute.xlu0 %59
  %62 = vset.pattern.permute.xlu0 1
  %63 = vperm.xlu0 %62, %v43
  %v64 = vpop.permute.xlu0 %63
  %v66 = vmul.f32 %v60, %v44
  %v67 = vmul.f32 %v64, %v45
  %68 = vset.pattern.permute.xlu0 2
  %69 = vperm.xlu0 %68, %v42
  %v70 = vpop.permute.xlu0 %69
  %72 = vset.pattern.permute.xlu0 2
  %73 = vperm.xlu0 %72, %v43
  %v74 = vpop.permute.xlu0 %73
  %v76 = vmul.f32 %v70, %v44
  %v77 = vmul.f32 %v74, %v45
  %80 = vrot.lane.b32.xlu0 %v66, 3
  %v81 = vpop.permute.xlu0 %80
  %82 = vrot.lane.b32.xlu0 %v67, 3
  %v83 = vpop.permute.xlu0 %82
  %88 = vrot.lane.b32.xlu0 %v76, 6
  %v89 = vpop.permute.xlu0 %88
  %90 = vrot.lane.b32.xlu0 %v77, 6
  %v91 = vpop.permute.xlu0 %90
  %vm94 = vcmask 23552
  %v95 = vsel %vm94, %v56, %v81
  %v96 = vsel %vm94, %v57, %v83
  %vm97 = vcmask 48128
  %v98 = vsel %vm97, %v95, %v89
  %v99 = vsel %vm97, %v96, %v91
  %v100 = vld [vmem:[#allocation2] sm:$0xff]
  %vm101 = vcmask 130048
  %v103 = vsel %vm101, %v41, 0
  %105 = vmatprep.subr.mxu0 0.0
  %106 = vmatpush1.msra.mxu0 %v98
  %107 = vmatprep.subr.mxu0 0.0
  %108 = vmatpush1.msra.mxu0 %v99
  %109 = vmatprep.subr.mxu0 0.0
  %110 = vmatpush1.msra.mxu0 0.0
  %111 = vmatprep.subr.mxu0 0.0
  %112 = vmatpush1.msra.mxu0 0.0
  %113 = vmatprep.subr.mxu0 0.0
  %114 = vmatpush1.msra.mxu0 0.0
  %115 = vmatprep.subr.mxu0 0.0
  %116 = vmatpush1.msra.mxu0 0.0
  %117 = vmatprep.subr.mxu0 0.0
  %118 = vmatpush1.msra.mxu0 0.0
  %119 = vmatprep.subr.mxu0 0.0
  %120 = vmatpush1.msra.mxu0 0.0
  %121 = vmatprep.subr.mxu0 0.0
  %122 = vmatpush1.msra.mxu0 0.0
  %123 = vmatprep.subr.mxu0 0.0
  %124 = vmatpush1.msra.mxu0 0.0
  %125 = vmatprep.subr.mxu0 0.0
  %126 = vmatpush1.msra.mxu0 0.0
  %127 = vmatprep.subr.mxu0 0.0
  %128 = vmatpush1.msra.mxu0 0.0
  %129 = vmatprep.subr.mxu0 0.0
  %130 = vmatpush1.msra.mxu0 0.0
  %131 = vmatprep.subr.mxu0 0.0
  %132 = vmatpush1.msra.mxu0 0.0
  %133 = vmatprep.subr.mxu0 0.0
  %134 = vmatpush1.msra.mxu0 0.0
  %135 = vmatprep.subr.mxu0 0.0
  %136 = vmatpush1.msra.mxu0 0.0
  %137 = vmatprep.subr.mxu0 0.0
  %138 = vmatpush1.msra.mxu0 0.0
  %139 = vmatprep.subr.mxu0 0.0
  %140 = vmatpush1.msra.mxu0 0.0
  %141 = vmatprep.subr.mxu0 0.0
  %142 = vmatpush1.msra.mxu0 0.0
  %143 = vmatprep.subr.mxu0 0.0
  %144 = vmatpush1.msra.mxu0 0.0
  %145 = vmatprep.subr.mxu0 0.0
  %146 = vmatpush1.msra.mxu0 0.0
  %147 = vmatprep.subr.mxu0 0.0
  %148 = vmatpush1.msra.mxu0 0.0
  %149 = vmatprep.subr.mxu0 0.0
  %150 = vmatpush1.msra.mxu0 0.0
  %151 = vmatprep.subr.mxu0 0.0
  %152 = vmatpush1.msra.mxu0 0.0
  %153 = vmatprep.subr.mxu0 0.0
  %154 = vmatpush1.msra.mxu0 0.0
  %155 = vmatprep.subr.mxu0 0.0
  %156 = vmatpush1.msra.mxu0 0.0
  %157 = vmatprep.subr.mxu0 0.0
  %158 = vmatpush1.msra.mxu0 0.0
  %159 = vmatprep.subr.mxu0 0.0
  %160 = vmatpush1.msra.mxu0 0.0
  %161 = vmatprep.subr.mxu0 0.0
  %162 = vmatpush1.msra.mxu0 0.0
  %163 = vmatprep.subr.mxu0 0.0
  %164 = vmatpush1.msra.mxu0 0.0
  %165 = vmatprep.subr.mxu0 0.0
  %166 = vmatpush1.msra.mxu0 0.0
  %167 = vmatprep.subr.mxu0 0.0
  %168 = vmatpush1.msra.mxu0 0.0
  %169 = vmatprep.mubr.f32.mxu0 0.0
  %170 = vmatmul.mubr.f32.gmra.mrb[0].mxu0 %v103
  %v171 = vpop.f32.mrb[0].mxu0
  %v172 = vadd.f32 0.0, %v171
  %v173 = vpop.f32.mrb[0].mxu0
  %174 = vdwg.mxu0
  %v175 = vadd.f32 %v100, %v172
  %vm176 = vcmask 72704
  %177 = vst.msk [vmem:[#allocation2] sm:$0xff] %vm176, %v175
  // Predicated region
  $region18: #{md_grad_out.3} parent=0 // pred_check
    %p178 = pneg %p14
  $region19: #{md_grad_out.3} parent=0 // pred_check_branch
    %180 = sbr.rel (%p178) target = $region21
  $region20: #{md_grad_out.3} parent=0 // pred_region
    %v181 = vld [vmem:[#allocation2] sm:$0xff]
    %v182 = vmul.f32 %v181, 0.5
    %183 = vst.msk [vmem:[%s3] sm:$0xff] %vm176, %v182
  $region21: #{md_grad_out.3} parent=0 // pred_fallthru
    _
  // Predicated region
  $region22: #{md_grad_out.3} parent=0 // pred_check
    _
  $region23: #{md_grad_out.3} parent=0 // pred_check_branch
    %185 = sbr.rel (0) target = $region25
  $region24: #{md_grad_out.3} parent=0 // pred_region
    _
  $region25: #{md_grad_out.3} parent=0 // pred_fallthru
    _
  // Predicated region
  $region26: #{md_grad_out.3} parent=0 // pred_check
    _
  $region27: #{md_grad_out.3} parent=0 // pred_check_branch
    %187 = sbr.rel (0) target = $region29
  $region28: #{md_grad_out.3} parent=0 // pred_region
    _
  $region29: #{md_grad_out.3} parent=0 // pred_fallthru
    _

</llo_original>
